<compile_context>
chip_gen: v5e
topology: v5e:2x2
jax: 0.10.0
libtpu: 0.0.40
codegen_flags: <defaults>
</compile_context>

<pallas_src>
import functools
import math

import jax
import jax.numpy as jnp
from jax.experimental import pallas as pl
from jax.experimental.pallas import tpu as pltpu


def _round_up(a: int, b: int) -> int:
    return ((a + b - 1) // b) * b


def _vmem_capacity_bytes() -> int:
    try:
        return int(pltpu.get_tpu_info().vmem_capacity_bytes)
    except Exception:
        return 64 << 20  # conservative fallback: v7x per-TensorCore VMEM


def _f1_kernel(x_ref, w0_ref, b0_ref, w1_ref, b1_ref, o_ref, acc_ref, *,
               compute_dtype):
    """One (row-tile, hidden-tile) grid step of the fused MLP."""
    j = pl.program_id(1)

    @pl.when(j == 0)
    def _():
        acc_ref[...] = jnp.zeros_like(acc_ref)

    # First matmul on the MXU, f32 accumulate. x is cast to the compute dtype
    # in VMEM (VPU) so the caller never pays an extra HBM cast/pad pass for x.
    x = x_ref[...].astype(compute_dtype)
    hidden = jnp.dot(x, w0_ref[...], preferred_element_type=jnp.float32)
    # Bias + ReLU epilogue in f32 on the VPU.
    hidden = jnp.maximum(hidden + b0_ref[...], 0.0)
    # Second matmul: contraction over this hidden tile, accumulated in f32.
    acc_ref[...] += jnp.dot(hidden.astype(w1_ref.dtype), w1_ref[...],
                            preferred_element_type=jnp.float32)

    @pl.when(j == pl.num_programs(1) - 1)
    def _():
        o_ref[...] = (acc_ref[...] + b1_ref[...]).astype(o_ref.dtype)


@functools.partial(jax.jit,
                   static_argnames=("k", "tm", "n_h_tiles", "vmem_cap"))
def _f1_forward_padded(x, w0_p, b0_p, w1_p, b1_p, *, k, tm, n_h_tiles,
                       vmem_cap):
    n, d = x.shape
    h_pad = w0_p.shape[1]
    k_pad = w1_p.shape[1]
    h_tile = h_pad // n_h_tiles
    compute_dtype = w0_p.dtype
    out_dtype = x.dtype if x.dtype == jnp.bfloat16 else jnp.float32

    # Row tile: large by default, clamped to the batch (multiple of 16 for
    # bf16 sublane packing). No batch padding -- ragged last block is masked.
    tm_eff = min(tm, _round_up(n, 16))
    n_row_tiles = pl.cdiv(n, tm_eff)

    w_item = jnp.dtype(compute_dtype).itemsize
    x_item = x.dtype.itemsize
    o_item = jnp.dtype(out_dtype).itemsize
    single_buffer_weights = (n_h_tiles == 1)

    # VMEM budget: weights (single-buffered when fully resident, else
    # double-buffered tiles), double-buffered x/out tiles, the f32 hidden temp
    # plus its bf16 cast copy, the in-kernel x cast copy, the f32 accumulator,
    # and headroom. Capped per-generation below physical VMEM.
    w_bufs = 1 if single_buffer_weights else 2
    weight_bytes = w_bufs * ((d * h_tile + h_tile * k_pad) * w_item
                             + (h_tile + k_pad) * 4)
    io_bytes = 2 * tm_eff * d * x_item + 2 * tm_eff * k_pad * o_item
    hidden_bytes = tm_eff * h_tile * (4 + w_item) + tm_eff * d * w_item
    acc_bytes = tm_eff * k_pad * 4
    need = weight_bytes + io_bytes + hidden_bytes + acc_bytes + (8 << 20)
    vmem_ceiling = max(vmem_cap - max(16 << 20, vmem_cap // 4), 32 << 20)
    vmem_limit = int(max(min(need, vmem_ceiling), 32 << 20))

    flops = 2 * n * (d * h_pad + h_pad * k_pad)
    bytes_accessed = (n * d * x_item
                      + (d * h_pad + h_pad * k_pad) * w_item
                      + (h_pad + k_pad) * 4
                      + n * k_pad * o_item)
    cost = pl.CostEstimate(flops=flops, transcendentals=0,
                           bytes_accessed=bytes_accessed)

    def _weight_spec(shape, index_map):
        # Constant-index resident weights: single-buffer to halve their VMEM
        # footprint (matters most on v7x's 64 MiB). When the hidden axis is
        # tiled the blocks change per step, so keep default double-buffering.
        if single_buffer_weights:
            try:
                return pl.BlockSpec(shape, index_map,
                                    pipeline_mode=pl.Buffered(1))
            except TypeError:  # BlockSpec without pipeline_mode support
                pass
        return pl.BlockSpec(shape, index_map)

    grid_spec = pltpu.PrefetchScalarGridSpec(
        num_scalar_prefetch=0,
        grid=(n_row_tiles, n_h_tiles),
        in_specs=[
            # x row tile: unpadded d (block dim == full dim is legal).
            # TODO(synk): pipeline_mode=pl.Buffered(3) here if profiling shows
            # the x DMA exposed for very large d with thin h.
            pl.BlockSpec((tm_eff, d), lambda i, j: (i, 0)),
            _weight_spec((d, h_tile), lambda i, j: (0, j)),      # w0 tile
            _weight_spec((1, h_tile), lambda i, j: (0, j)),      # b0 tile
            _weight_spec((h_tile, k_pad), lambda i, j: (j, 0)),  # w1 tile
            _weight_spec((1, k_pad), lambda i, j: (0, 0)),       # b1
        ],
        out_specs=pl.BlockSpec((tm_eff, k_pad), lambda i, j: (i, 0)),
        scratch_shapes=[pltpu.VMEM((tm_eff, k_pad), jnp.float32)],
    )

    out_p = pl.pallas_call(
        functools.partial(_f1_kernel, compute_dtype=compute_dtype),
        out_shape=jax.ShapeDtypeStruct((n, k_pad), out_dtype),
        grid_spec=grid_spec,
        compiler_params=pltpu.CompilerParams(
            dimension_semantics=("parallel", "arbitrary"),
            vmem_limit_bytes=vmem_limit),
        cost_estimate=cost,
    )(x, w0_p, b0_p, w1_p, b1_p)

    # Kernel stores lane-dense (k_pad wide); slice the real k columns here.
    return out_p[:, :k]


def make_f1_forward(w0, b0, w1, b1, *, use_bf16=True, tm=512, h_tile=None):
    """Pad/cast the parameters ONCE and return a jitted forward(x) closure."""
    d, h = w0.shape
    k = w1.shape[1]
    h_pad = _round_up(h, 128)
    k_pad = _round_up(k, 128)
    compute_dtype = jnp.bfloat16 if use_bf16 else jnp.float32
    w_item = 2 if use_bf16 else 4

    vmem_cap = _vmem_capacity_bytes()
    usable = max(vmem_cap - max(16 << 20, vmem_cap // 4), 32 << 20)

    if h_tile is None:
        # Keep both weight matrices resident if they fit comfortably; otherwise
        # tile the hidden (contraction) axis of the second matmul.
        budget = int(0.55 * usable)
        full_weight_bytes = ((d * h_pad + h_pad * k_pad) * w_item
                             + (h_pad + k_pad) * 4)
        if full_weight_bytes <= budget:
            h_tile = h_pad
        else:
            n_cols = h_pad // 128
            h_tile = 128
            for t in range(n_cols, 0, -1):
                if n_cols % t:
                    continue
                cand = t * 128
                if 2 * ((d + k_pad) * cand * w_item + cand * 4) <= budget:
                    h_tile = cand
                    break
    if h_tile % 128 != 0 or h_pad % h_tile != 0:
        raise ValueError(f"h_tile={h_tile} must be a multiple of 128 dividing "
                         f"h_pad={h_pad}")
    n_h_tiles = h_pad // h_tile

    # One-time zero-padding + cast (hoisted out of the per-call path). Zero
    # padding is exact: padded hidden columns get bias 0 and relu(0)=0, padded
    # w1 rows are 0, padded k columns are sliced off after the kernel.
    w0_p = jnp.zeros((d, h_pad), compute_dtype).at[:, :h].set(
        w0.astype(compute_dtype))
    w1_p = jnp.zeros((h_pad, k_pad), compute_dtype).at[:h, :k].set(
        w1.astype(compute_dtype))
    b0_p = jnp.zeros((1, h_pad), jnp.float32).at[0, :h].set(
        b0.astype(jnp.float32))
    b1_p = jnp.zeros((1, k_pad), jnp.float32).at[0, :k].set(
        b1.astype(jnp.float32))
    w0_p, w1_p, b0_p, b1_p = jax.block_until_ready((w0_p, w1_p, b0_p, b1_p))

    def forward(x):
        return _f1_forward_padded(x, w0_p, b0_p, w1_p, b1_p, k=k, tm=tm,
                                  n_h_tiles=n_h_tiles, vmem_cap=vmem_cap)

    return forward


def f1_reference(x, w0, b0, w1, b1):
    hp = jax.lax.Precision.HIGHEST
    hidden = jnp.maximum(jnp.dot(x, w0, precision=hp) + b0, 0.0)
    return jnp.dot(hidden, w1, precision=hp) + b1


if __name__ == "__main__":
    # Small shapes consistent with F1(h, d, k): input dim d, hidden h, classes k.
    n, d, h, k = 48, 64, 32, 10

    key = jax.random.PRNGKey(0)
    kx, kw0, kb0, kw1, kb1, kw0b, kb0b, kw1b, kb1b = jax.random.split(key, 9)

    alpha0 = 1.0 / math.sqrt(d)
    alpha1 = 1.0 / math.sqrt(h)
    x = jax.random.normal(kx, (n, d), dtype=jnp.float32)
    w0 = jax.random.uniform(kw0, (d, h), jnp.float32, -alpha0, alpha0)
    b0 = jax.random.uniform(kb0, (h,), jnp.float32, -alpha0, alpha0)
    w1 = jax.random.uniform(kw1, (h, k), jnp.float32, -alpha1, alpha1)
    b1 = jax.random.uniform(kb1, (k,), jnp.float32, -alpha1, alpha1)
    ref = f1_reference(x, w0, b0, w1, b1)

    # 1) f32 compute path, small row tile -> 2 row blocks, ragged last block.
    out_f32 = jax.block_until_ready(
        make_f1_forward(w0, b0, w1, b1, use_bf16=False, tm=32)(x))
    assert out_f32.shape == (n, k)
    assert jnp.allclose(out_f32, ref, atol=2e-2, rtol=2e-2), "f32 mismatch"

    # 2) bf16 compute path (default): MXU-native, f32 accumulation.
    out_bf16 = jax.block_until_ready(make_f1_forward(w0, b0, w1, b1)(x))
    assert out_bf16.shape == (n, k)
    assert jnp.allclose(out_bf16, ref, atol=3e-2, rtol=3e-2), "bf16 mismatch"

    # 3) hidden-tiled (contraction grid axis + f32 accumulator) fallback path,
    #    forced via h_tile to exercise the v7x large-weight code path.
    h2 = 256
    alpha1b = 1.0 / math.sqrt(h2)
    w0b = jax.random.uniform(kw0b, (d, h2), jnp.float32, -alpha0, alpha0)
    b0b = jax.random.uniform(kb0b, (h2,), jnp.float32, -alpha0, alpha0)
    w1b = jax.random.uniform(kw1b, (h2, k), jnp.float32, -alpha1b, alpha1b)
    b1b = jax.random.uniform(kb1b, (k,), jnp.float32, -alpha1b, alpha1b)
    ref_b = f1_reference(x, w0b, b0b, w1b, b1b)
    out_tiled = jax.block_until_ready(
        make_f1_forward(w0b, b0b, w1b, b1b, use_bf16=False, tm=32,
                        h_tile=128)(x))
    assert out_tiled.shape == (n, k)
    assert jnp.allclose(out_tiled, ref_b, atol=2e-2, rtol=2e-2), "h-tiled mismatch"

    print("KERNEL_OK")
</pallas_src>

<mosaic_0001>
module attributes {stable_mosaic.version = 11 : i64} {
  func.func @_f1_kernel(%arg0: i32, %arg1: i32, %arg2: memref<32x64xf32, #tpu.memory_space<vmem>>, %arg3: memref<64x128xf32, #tpu.memory_space<vmem>>, %arg4: memref<1x128xf32, #tpu.memory_space<vmem>>, %arg5: memref<128x128xf32, #tpu.memory_space<vmem>>, %arg6: memref<1x128xf32, #tpu.memory_space<vmem>>, %arg7: memref<32x128xf32, #tpu.memory_space<vmem>>, %arg8: memref<32x128xf32, #tpu.memory_space<vmem>>) attributes {dimension_semantics = [#tpu.dimension_semantics<parallel>, #tpu.dimension_semantics<arbitrary>], iteration_bounds = array<i64: 2, 1>, scalar_prefetch = 0 : i64, scratch_operands = 1 : i64, tpu.core_type = #tpu.core_type<tc>, window_params = [{transform_indices = @transform_0, window_bounds = array<i64: 32, 64>}, {pipeline_mode = #tpu.pipeline_mode<synchronous>, transform_indices = @transform_1, window_bounds = array<i64: 64, 128>}, {pipeline_mode = #tpu.pipeline_mode<synchronous>, transform_indices = @transform_2, window_bounds = array<i64: 1, 128>}, {pipeline_mode = #tpu.pipeline_mode<synchronous>, transform_indices = @transform_3, window_bounds = array<i64: 128, 128>}, {pipeline_mode = #tpu.pipeline_mode<synchronous>, transform_indices = @transform_4, window_bounds = array<i64: 1, 128>}, {transform_indices = @transform_5, window_bounds = array<i64: 32, 128>}]} {
    %c0_i32 = arith.constant 0 : i32
    %0 = arith.cmpi eq, %arg1, %c0_i32 : i32
    %1 = arith.extui %0 : i1 to i32
    %c0_i32_0 = arith.constant 0 : i32
    %2 = arith.cmpi ne, %1, %c0_i32_0 : i32
    scf.if %2 {
      %cst_16 = arith.constant 0.000000e+00 : f32
      %19 = vector.broadcast %cst_16 : f32 to vector<32x128xf32>
      %c0_17 = arith.constant 0 : index
      %c0_18 = arith.constant 0 : index
      %20 = vector.load %arg8[%c0_17, %c0_18] : memref<32x128xf32, #tpu.memory_space<vmem>>, vector<32x128xf32>
      tpu.vector_store %arg8[%c0_17, %c0_18], %19 {strides = array<i32>} : memref<32x128xf32, #tpu.memory_space<vmem>>, vector<32x128xf32>,
    } else {
    }
    %c0 = arith.constant 0 : index
    %c0_1 = arith.constant 0 : index
    %3 = vector.load %arg2[%c0, %c0_1] : memref<32x64xf32, #tpu.memory_space<vmem>>, vector<32x64xf32>
    %c0_2 = arith.constant 0 : index
    %c0_3 = arith.constant 0 : index
    %4 = vector.load %arg3[%c0_2, %c0_3] : memref<64x128xf32, #tpu.memory_space<vmem>>, vector<64x128xf32>
    %cst = arith.constant dense<0.000000e+00> : vector<32x128xf32>
    %5 = tpu.matmul %3, %4, %cst {dimension_numbers = #tpu.dot_dimension_numbers<[1], [0], [0], [1], [0, 0, 1, 1], [], []>} : vector<32x64xf32>, vector<64x128xf32>, vector<32x128xf32> -> vector<32x128xf32>
    %c0_4 = arith.constant 0 : index
    %c0_5 = arith.constant 0 : index
    %6 = vector.load %arg4[%c0_4, %c0_5] : memref<1x128xf32, #tpu.memory_space<vmem>>, vector<1x128xf32>
    %7 = vector.broadcast %6 : vector<1x128xf32> to vector<32x128xf32>
    %8 = arith.addf %5, %7 : vector<32x128xf32>
    %cst_6 = arith.constant 0.000000e+00 : f32
    %9 = vector.broadcast %cst_6 : f32 to vector<32x128xf32>
    %10 = arith.maximumf %8, %9 : vector<32x128xf32>
    %c0_7 = arith.constant 0 : index
    %c0_8 = arith.constant 0 : index
    %11 = vector.load %arg8[%c0_7, %c0_8] : memref<32x128xf32, #tpu.memory_space<vmem>>, vector<32x128xf32>
    %c0_9 = arith.constant 0 : index
    %c0_10 = arith.constant 0 : index
    %12 = vector.load %arg5[%c0_9, %c0_10] : memref<128x128xf32, #tpu.memory_space<vmem>>, vector<128x128xf32>
    %cst_11 = arith.constant dense<0.000000e+00> : vector<32x128xf32>
    %13 = tpu.matmul %10, %12, %cst_11 {dimension_numbers = #tpu.dot_dimension_numbers<[1], [0], [0], [1], [0, 0, 1, 1], [], []>} : vector<32x128xf32>, vector<128x128xf32>, vector<32x128xf32> -> vector<32x128xf32>
    %14 = arith.addf %11, %13 : vector<32x128xf32>
    %c0_12 = arith.constant 0 : index
    %c0_13 = arith.constant 0 : index
    %15 = vector.load %arg8[%c0_12, %c0_13] : memref<32x128xf32, #tpu.memory_space<vmem>>, vector<32x128xf32>
    tpu.vector_store %arg8[%c0_12, %c0_13], %14 {strides = array<i32>} : memref<32x128xf32, #tpu.memory_space<vmem>>, vector<32x128xf32>,
    %c0_i32_14 = arith.constant 0 : i32
    %16 = arith.cmpi eq, %arg1, %c0_i32_14 : i32
    %17 = arith.extui %16 : i1 to i32
    %c0_i32_15 = arith.constant 0 : i32
    %18 = arith.cmpi ne, %17, %c0_i32_15 : i32
    scf.if %18 {
      %c0_16 = arith.constant 0 : index
      %c0_17 = arith.constant 0 : index
      %19 = vector.load %arg8[%c0_16, %c0_17] : memref<32x128xf32, #tpu.memory_space<vmem>>, vector<32x128xf32>
      %c0_18 = arith.constant 0 : index
      %c0_19 = arith.constant 0 : index
      %20 = vector.load %arg6[%c0_18, %c0_19] : memref<1x128xf32, #tpu.memory_space<vmem>>, vector<1x128xf32>
      %21 = vector.broadcast %20 : vector<1x128xf32> to vector<32x128xf32>
      %22 = arith.addf %19, %21 : vector<32x128xf32>
      %c0_20 = arith.constant 0 : index
      %c0_21 = arith.constant 0 : index
      %23 = vector.load %arg7[%c0_20, %c0_21] : memref<32x128xf32, #tpu.memory_space<vmem>>, vector<32x128xf32>
      tpu.vector_store %arg7[%c0_20, %c0_21], %22 {strides = array<i32>} : memref<32x128xf32, #tpu.memory_space<vmem>>, vector<32x128xf32>,
    } else {
    }
    return
  }
  func.func @transform_0(%arg0: i32, %arg1: i32) -> (i32, i32) {
    %c0_i32 = arith.constant 0 : i32
    %c0_i32_0 = arith.constant 0 : i32
    return %arg0, %c0_i32 : i32, i32
  }
  func.func @transform_1(%arg0: i32, %arg1: i32) -> (i32, i32) {
    %c0_i32 = arith.constant 0 : i32
    %c0_i32_0 = arith.constant 0 : i32
    return %c0_i32, %arg1 : i32, i32
  }
  func.func @transform_2(%arg0: i32, %arg1: i32) -> (i32, i32) {
    %c0_i32 = arith.constant 0 : i32
    %c0_i32_0 = arith.constant 0 : i32
    return %c0_i32, %arg1 : i32, i32
  }
  func.func @transform_3(%arg0: i32, %arg1: i32) -> (i32, i32) {
    %c0_i32 = arith.constant 0 : i32
    %c0_i32_0 = arith.constant 0 : i32
    return %arg1, %c0_i32 : i32, i32
  }
  func.func @transform_4(%arg0: i32, %arg1: i32) -> (i32, i32) {
    %c0_i32 = arith.constant 0 : i32
    %c0_i32_0 = arith.constant 0 : i32
    %c0_i32_1 = arith.constant 0 : i32
    return %c0_i32, %c0_i32_0 : i32, i32
  }
  func.func @transform_5(%arg0: i32, %arg1: i32) -> (i32, i32) {
    %c0_i32 = arith.constant 0 : i32
    %c0_i32_0 = arith.constant 0 : i32
    return %arg0, %c0_i32 : i32, i32
  }
}

</mosaic_0001>

<llo_original>
// kernel: _f1_forward_padded.1
$region0: #{_f1_forward_padded.1}
  #allocation0 [shape = 'u32[]', space=smem, size = 0x4, offset = 0x4, fixed_abs, tag = 'smem constant byte address 0x4 - core index']
  #allocation1 [shape = 'u32[72,128]{1,0:T(1,128)}', space=vmem, size = 0x9000, scoped, tag = 'internal scratch']
  #allocation2 [shape = 'f32[32,128]{1,0:T(8,128)}', space=vmem, size = 0x4000, scoped, tag = 'scratch operand']
  %s0 = inlined_call_operand.hbm [shape: f32[48,64], index: 0, kind: input, shape index: {}]
  %s1 = inlined_call_operand.hbm [shape: f32[64,128], index: 1, kind: input, shape index: {}]
  %s2 = inlined_call_operand.vmem [shape: f32[1,128], index: 2, kind: input, shape index: {}]
  %s3 = inlined_call_operand.hbm [shape: f32[128,128], index: 3, kind: input, shape index: {}]
  %s4 = inlined_call_operand.vmem [shape: f32[1,128], index: 4, kind: input, shape index: {}]
  %s5 = inlined_call_operand.vmem [shape: f32[48,128], index: 5, kind: output, shape index: {}]
  %s6 = sld [smem:[#allocation0]]
  $region121: #{_f1_forward_padded.1} parent=0
    _
  %s8 = ssub.s32 1, %s6
  %s9 = scalar_select 0, %s8, %s6
  $region1: #{_f1_forward_padded.1} parent=0
    #allocation3 [shape = 'u8[32768]{0}', space=vmem, size = 0x8000, scoped, tag = 'input window, operand 0']
    #allocation4 [shape = 's32[2]{0}', space=sflag, size = 0x8, scoped, tag = 'scoped memory for _f1_forward_padded.1']
    #allocation5 [shape = 'u8[32768]{0}', space=vmem, size = 0x8000, scoped, tag = 'input window, operand 1, single buffered']
    #allocation6 [shape = 's32[1]{0}', space=sflag, size = 0x4, scoped, tag = 'scoped memory for _f1_forward_padded.1']
    #allocation7 [shape = 'u8[65536]{0}', space=vmem, size = 0x10000, scoped, tag = 'input window, operand 3, single buffered']
    #allocation8 [shape = 'u8[32768]{0}', space=vmem, size = 0x8000, scoped, tag = 'output window, operand 0']
    %10 = vsyncpa [#allocation4], 0
    %s11 = scalar_lea.sflag [#allocation4], 1
    %12 = vsyncpa %s11, 0
    %13 = vsyncpa [#allocation6], 0
    loop: start=0, step=1, limit=4
    $region2: #{_f1_forward_padded.1} parent=1 // loop_pre_header
      _
    $region3: #{_f1_forward_padded.1} parent=1 // loop_header
      %s15 = sphi 0, %s19
      %p16 = scmp.ge.s32.totalorder %s15, 4
      %s22 = sphi 0, %s34
      %s23 = sphi 0, %s30
      %s24 = sphi 0, %s22
      %s25 = sphi 0, %s23
      %s26 = sphi 0, %s24
      %s27 = sphi 0, %s25
      %s37 = sphi 0, %s39
      %s40 = sphi 0, %s37
      %s41 = sphi 0, %s40
      %s57 = sphi 0, %s41
      %s63 = sphi 0, %s65
      %s66 = sphi 0, %s63
      %s67 = sphi 0, %s66
      %s83 = sphi 0, %s67
      %s89 = sphi 0, %s91
      %s92 = sphi 0, %s89
      %s93 = sphi 0, %s92
      %s109 = sphi 0, %s93
      %s115 = sphi 0, %s117
      %s118 = sphi 0, %s115
      %s119 = sphi 0, %s118
      %s135 = sphi 0, %s119
      %s139 = sphi 0, %s139
      %s141 = sphi 0, %s139
      %s142 = sphi 0, %s141
      %s156 = sphi 0, %s142
      %s162 = sphi 0, %s164
      %s165 = sphi 0, %s162
      %s166 = sphi 0, %s165
      %s182 = sphi 0, %s166
    $region4: #{_f1_forward_padded.1} parent=1 // loop_header_branch
      %18 = sbr.rel (%p16) target = $region8
    $region5: #{_f1_forward_padded.1} parent=1 // loop_body
      %s20 = ssub.s32 %s15, 1
      %s21 = ssub.s32 %s15, 2
      %s28 = sadd.s32 1, %s23
      %p29 = scmp.ge.s32.totalorder %s28, 1
      %s30 = scalar_select %p29, 0, %s28
      %s31 = sadd.s32 1, %s22
      %s32 = scalar_select %p29, %s31, %s22
      %p33 = scmp.ge.s32.totalorder %s32, 2
      %s34 = scalar_select %p33, 0, %s32
      %s35 = ssub.s32 %s22, %s34
      %p36 = scmp.eq.s32.totalorder %s35, 0
      %s38 = sadd.s32 %s37, 1
      %s39 = scalar_select %p36, %s37, %s38
      %p42 = pneg %p36
      %p43 = scmp.eq.s32.totalorder %s15, 1
      %p44 = por %p42, %p43
      %p45 = scmp.ne.s32.totalorder %s37, %s40
      %p46 = scmp.eq.s32.totalorder %s15, 0
      %p47 = por %p45, %p46
      %p48 = scmp.ne.s32.totalorder %s37, %s40
      %p49 = scmp.eq.s32.totalorder %s20, 1
      %p50 = por %p48, %p49
      %p51 = scmp.ne.s32.totalorder %s40, %s41
      %p52 = scmp.eq.s32.totalorder %s20, 0
      %p53 = por %p51, %p52
      %p54 = scmp.ne.s32.totalorder %s40, %s41
      %p55 = scmp.eq.s32.totalorder %s21, 1
      %p56 = por %p54, %p55
      %p58 = scmp.ne.s32.totalorder %s41, %s57
      %p59 = scmp.eq.s32.totalorder %s21, 0
      %p60 = por %p58, %p59
      %s61 = ssub.s32 %s23, %s30
      %p62 = scmp.eq.s32.totalorder %s61, 0
      %s64 = sadd.s32 %s63, 1
      %s65 = scalar_select %p62, %s63, %s64
      %p68 = pneg %p62
      %p69 = scmp.eq.s32.totalorder %s15, 1
      %p70 = por %p68, %p69
      %p71 = scmp.ne.s32.totalorder %s63, %s66
      %p72 = scmp.eq.s32.totalorder %s15, 0
      %p73 = por %p71, %p72
      %p74 = scmp.ne.s32.totalorder %s63, %s66
      %p75 = scmp.eq.s32.totalorder %s20, 1
      %p76 = por %p74, %p75
      %p77 = scmp.ne.s32.totalorder %s66, %s67
      %p78 = scmp.eq.s32.totalorder %s20, 0
      %p79 = por %p77, %p78
      %p80 = scmp.ne.s32.totalorder %s66, %s67
      %p81 = scmp.eq.s32.totalorder %s21, 1
      %p82 = por %p80, %p81
      %p84 = scmp.ne.s32.totalorder %s67, %s83
      %p85 = scmp.eq.s32.totalorder %s21, 0
      %p86 = por %p84, %p85
      %s87 = ssub.s32 %s23, %s30
      %p88 = scmp.eq.s32.totalorder %s87, 0
      %s90 = sadd.s32 %s89, 1
      %s91 = scalar_select %p88, %s89, %s90
      %p94 = pneg %p88
      %p95 = scmp.eq.s32.totalorder %s15, 1
      %p96 = por %p94, %p95
      %p97 = scmp.ne.s32.totalorder %s89, %s92
      %p98 = scmp.eq.s32.totalorder %s15, 0
      %p99 = por %p97, %p98
      %p100 = scmp.ne.s32.totalorder %s89, %s92
      %p101 = scmp.eq.s32.totalorder %s20, 1
      %p102 = por %p100, %p101
      %p103 = scmp.ne.s32.totalorder %s92, %s93
      %p104 = scmp.eq.s32.totalorder %s20, 0
      %p105 = por %p103, %p104
      %p106 = scmp.ne.s32.totalorder %s92, %s93
      %p107 = scmp.eq.s32.totalorder %s21, 1
      %p108 = por %p106, %p107
      %p110 = scmp.ne.s32.totalorder %s93, %s109
      %p111 = scmp.eq.s32.totalorder %s21, 0
      %p112 = por %p110, %p111
      %s113 = ssub.s32 %s23, %s30
      %p114 = scmp.eq.s32.totalorder %s113, 0
      %s116 = sadd.s32 %s115, 1
      %s117 = scalar_select %p114, %s115, %s116
      %p120 = pneg %p114
      %p121 = scmp.eq.s32.totalorder %s15, 1
      %p122 = por %p120, %p121
      %p123 = scmp.ne.s32.totalorder %s115, %s118
      %p124 = scmp.eq.s32.totalorder %s15, 0
      %p125 = por %p123, %p124
      %p126 = scmp.ne.s32.totalorder %s115, %s118
      %p127 = scmp.eq.s32.totalorder %s20, 1
      %p128 = por %p126, %p127
      %p129 = scmp.ne.s32.totalorder %s118, %s119
      %p130 = scmp.eq.s32.totalorder %s20, 0
      %p131 = por %p129, %p130
      %p132 = scmp.ne.s32.totalorder %s118, %s119
      %p133 = scmp.eq.s32.totalorder %s21, 1
      %p134 = por %p132, %p133
      %p136 = scmp.ne.s32.totalorder %s119, %s135
      %p137 = scmp.eq.s32.totalorder %s21, 0
      %p138 = por %p136, %p137
      %s140 = sadd.s32 %s139, 1
      %p143 = scmp.eq.s32.totalorder %s15, 1
      %p144 = scmp.ne.s32.totalorder %s139, %s141
      %p145 = scmp.eq.s32.totalorder %s15, 0
      %p146 = por %p144, %p145
      %p147 = scmp.ne.s32.totalorder %s139, %s141
      %p148 = scmp.eq.s32.totalorder %s20, 1
      %p149 = por %p147, %p148
      %p150 = scmp.ne.s32.totalorder %s141, %s142
      %p151 = scmp.eq.s32.totalorder %s20, 0
      %p152 = por %p150, %p151
      %p153 = scmp.ne.s32.totalorder %s141, %s142
      %p154 = scmp.eq.s32.totalorder %s21, 1
      %p155 = por %p153, %p154
      %p157 = scmp.ne.s32.totalorder %s142, %s156
      %p158 = scmp.eq.s32.totalorder %s21, 0
      %p159 = por %p157, %p158
      %s160 = ssub.s32 %s22, %s34
      %p161 = scmp.eq.s32.totalorder %s160, 0
      %s163 = sadd.s32 %s162, 1
      %s164 = scalar_select %p161, %s162, %s163
      %p167 = pneg %p161
      %p168 = scmp.eq.s32.totalorder %s15, 1
      %p169 = por %p167, %p168
      %p170 = scmp.ne.s32.totalorder %s162, %s165
      %p171 = scmp.eq.s32.totalorder %s15, 0
      %p172 = por %p170, %p171
      %p173 = scmp.ne.s32.totalorder %s162, %s165
      %p174 = scmp.eq.s32.totalorder %s20, 1
      %p175 = por %p173, %p174
      %p176 = scmp.ne.s32.totalorder %s165, %s166
      %p177 = scmp.eq.s32.totalorder %s20, 0
      %p178 = por %p176, %p177
      %p179 = scmp.ne.s32.totalorder %s165, %s166
      %p180 = scmp.eq.s32.totalorder %s21, 1
      %p181 = por %p179, %p180
      %p183 = scmp.ne.s32.totalorder %s166, %s182
      %p184 = scmp.eq.s32.totalorder %s21, 0
      %p185 = por %p183, %p184
      %p186 = scmp.le.s32.totalorder 1, %s15
      %p187 = scmp.lt.s32.totalorder %s15, 3
      %p188 = pnand %p186, %p187
      %p189 = pneg %p188
      // Predicated region
      $region9: #{_f1_forward_padded.1} parent=5 // pred_check
        _
      $region10: #{_f1_forward_padded.1} parent=5 // pred_check_branch
        %191 = sbr.rel (%p188) target = $region12
      $region11: #{_f1_forward_padded.1} parent=5 // pred_region
        %s192 = ssub.s32 %s15, 1
        // Predicated region
        $region13: #{_f1_forward_padded.1} parent=11 // pred_check
          %p193 = pneg %p79
        $region14: #{_f1_forward_padded.1} parent=11 // pred_check_branch
          %195 = sbr.rel (%p193) target = $region16
        $region15: #{_f1_forward_padded.1} parent=11 // pred_region
          %197 = vsyncadd [#allocation6], 0
          %s198 = smul.addr %s25, 8
          %s199 = scalar_lea.hbm %s1, %s198
          %s200 = sshll.u32 %s199, 4
          %s201 = int_to_ptr.hbm [resolvable:$true] %s200
          %s202 = sshll.u32 [#allocation5], 4
          %s203 = int_to_ptr.vmem [resolvable:$true] %s202
          %208 = dma.hbm_to_vmem [thread:$0]  %s201, 1024, %s203, [#allocation6], 128, 128, 8
        $region16: #{_f1_forward_padded.1} parent=11 // pred_fallthru
          _
        // Predicated region
        $region17: #{_f1_forward_padded.1} parent=11 // pred_check
          %p209 = pneg %p105
        $region18: #{_f1_forward_padded.1} parent=11 // pred_check_branch
          %211 = sbr.rel (%p209) target = $region20
        $region19: #{_f1_forward_padded.1} parent=11 // pred_region
          %p212 = scmp.lt.s32.totalorder %s25, 0
          %s213 = scalar_select %p212, %s25, 0
          %s214 = scalar_lea.vmem %s2, %s213
        $region20: #{_f1_forward_padded.1} parent=11 // pred_fallthru
          _
        // Predicated region
        $region21: #{_f1_forward_padded.1} parent=11 // pred_check
          %p215 = pneg %p131
        $region22: #{_f1_forward_padded.1} parent=11 // pred_check_branch
          %217 = sbr.rel (%p215) target = $region24
        $region23: #{_f1_forward_padded.1} parent=11 // pred_region
          %s218 = smul.u32 16, %s25
          %220 = vsyncadd [#allocation6], 0
          %s221 = smul.addr %s218, 8
          %s222 = scalar_lea.hbm %s3, %s221
          %s223 = sshll.u32 %s222, 4
          %s224 = int_to_ptr.hbm [resolvable:$true] %s223
          %s225 = sshll.u32 [#allocation7], 4
          %s226 = int_to_ptr.vmem [resolvable:$true] %s225
          %231 = dma.hbm_to_vmem [thread:$0]  %s224, 2048, %s226, [#allocation6], 128, 128, 8
        $region24: #{_f1_forward_padded.1} parent=11 // pred_fallthru
          _
        // Predicated region
        $region25: #{_f1_forward_padded.1} parent=11 // pred_check
          %p232 = pneg %p152
        $region26: #{_f1_forward_padded.1} parent=11 // pred_check_branch
          %234 = sbr.rel (%p232) target = $region28
        $region27: #{_f1_forward_padded.1} parent=11 // pred_region
          _
        $region28: #{_f1_forward_padded.1} parent=11 // pred_fallthru
          _
      $region12: #{_f1_forward_padded.1} parent=5 // pred_fallthru
        _
      %p235 = scmp.lt.s32.totalorder %s15, 2
      // Predicated region
      $region29: #{_f1_forward_padded.1} parent=5 // pred_check
        %p236 = pneg %p235
      $region30: #{_f1_forward_padded.1} parent=5 // pred_check_branch
        %238 = sbr.rel (%p236) target = $region32
      $region31: #{_f1_forward_padded.1} parent=5 // pred_region
        // Predicated region
        $region33: #{_f1_forward_padded.1} parent=31 // pred_check
          %p239 = pneg %p47
        $region34: #{_f1_forward_padded.1} parent=31 // pred_check_branch
          %241 = sbr.rel (%p239) target = $region36
        $region35: #{_f1_forward_padded.1} parent=31 // pred_region
          %s242 = sand.u32 %s37, 1
          %s243 = scalar_lea.sflag [#allocation4], %s242
          %s244 = sand.u32 %s37, 1
          %s245 = smul.addr %s244, 32
          %s246 = scalar_lea.vmem [#allocation3], %s245
          %s247 = smul.u32 4, %s22
          %s248 = ssub.s32 6, %s247
          %p249 = scmp.lt.s32.totalorder %s248, 4
          %s250 = scalar_select %p249, %s248, 4
          %s251 = smul.u32 8, %s250
          %s252 = ssub.s32 32, %s251
          %s253 = sshll.u32 %s252, 4
          %254 = vsyncadd %s243, %s253
          %p255 = scmp.ne.s32.totalorder 0, %s251
          %s256 = smul.addr %s247, 8
          %s257 = scalar_lea.hbm %s0, %s256
          %s258 = smul.u32 8, %s250
          %s259 = sshll.u32 %s257, 4
          %s260 = int_to_ptr.hbm [resolvable:$true] %s259
          %s261 = sshll.u32 %s246, 4
          %s262 = int_to_ptr.vmem [resolvable:$true] %s261
          %s263 = sshll.u32 %s258, 4
          %267 = dma.hbm_to_vmem [thread:$0]  (%p255), %s260, %s263, %s262, %s243, 128, 128, 8
        $region36: #{_f1_forward_padded.1} parent=31 // pred_fallthru
          _
      $region32: #{_f1_forward_padded.1} parent=5 // pred_fallthru
        _
      %p268 = scmp.le.s32.totalorder 1, %s15
      %p269 = scmp.lt.s32.totalorder %s15, 3
      %p270 = pnand %p268, %p269
      %p271 = pneg %p270
      // Predicated region
      $region37: #{_f1_forward_padded.1} parent=5 // pred_check
        _
      $region38: #{_f1_forward_padded.1} parent=5 // pred_check_branch
        %273 = sbr.rel (%p270) target = $region40
      $region39: #{_f1_forward_padded.1} parent=5 // pred_region
        %s274 = ssub.s32 %s15, 1
        %s275 = sand.u32 %s40, 1
        %s276 = scalar_lea.sflag [#allocation4], %s275
        %s277 = sand.u32 %s40, 1
        %s278 = smul.addr %s277, 32
        %s279 = scalar_lea.vmem [#allocation3], %s278
        // Predicated region
        $region41: #{_f1_forward_padded.1} parent=39 // pred_check
          %p280 = pneg %p53
        $region42: #{_f1_forward_padded.1} parent=39 // pred_check_branch
          %282 = sbr.rel (%p280) target = $region44
        $region43: #{_f1_forward_padded.1} parent=39 // pred_region
          %284 = dma.done %s276, 512
        $region44: #{_f1_forward_padded.1} parent=39 // pred_fallthru
          _
        // Predicated region
        $region45: #{_f1_forward_padded.1} parent=39 // pred_check
          %p285 = pneg %p79
        $region46: #{_f1_forward_padded.1} parent=39 // pred_check_branch
          %287 = sbr.rel (%p285) target = $region48
        $region47: #{_f1_forward_padded.1} parent=39 // pred_region
          %289 = dma.done [#allocation6], 1024
        $region48: #{_f1_forward_padded.1} parent=39 // pred_fallthru
          _
        // Predicated region
        $region49: #{_f1_forward_padded.1} parent=39 // pred_check
          %p290 = pneg %p131
        $region50: #{_f1_forward_padded.1} parent=39 // pred_check_branch
          %292 = sbr.rel (%p290) target = $region52
        $region51: #{_f1_forward_padded.1} parent=39 // pred_region
          %294 = dma.done [#allocation6], 2048
        $region52: #{_f1_forward_padded.1} parent=39 // pred_fallthru
          _
        %s295 = sand.u32 %s40, 1
        %s296 = scalar_lea.sflag [#allocation4], %s295
        %s297 = sand.u32 %s40, 1
        %s298 = smul.addr %s297, 32
        %s299 = scalar_lea.vmem [#allocation3], %s298
        %p300 = pneg %p53
        %p301 = pneg %p50
        %p302 = pneg %p79
        %p303 = pneg %p76
        %p304 = scmp.lt.s32.totalorder %s25, 0
        %s305 = scalar_select %p304, %s25, 0
        %s306 = scalar_lea.vmem %s2, %s305
        %p307 = pneg %p105
        %p308 = pneg %p102
        %p309 = pneg %p131
        %p310 = pneg %p128
        %p311 = pneg %p152
        %p312 = pneg %p149
        %p313 = pneg %p178
        %p314 = pneg %p175
        %s315 = sand.u32 %s165, 1
        %s316 = sand.u32 %s165, 1
        %s317 = smul.addr %s316, 32
        %s318 = scalar_lea.vmem [#allocation8], %s317
        %s319 = smul.u32 4, %s24
        %s320 = ssub.s32 6, %s319
        %p321 = scmp.lt.s32.totalorder %s320, 4
        %s322 = scalar_select %p321, %s320, 4
        %s323 = smul.u32 8, %s322
        %p324 = scmp.lt.s32.totalorder %s25, 0
        %s325 = scalar_select %p324, %s25, 0
        %s326 = scalar_lea.vmem %s2, %s325
        %s327 = smul.u32 16, %s25
        %s328 = smul.u32 4, %s24
        %s329 = ssub.s32 6, %s328
        %p330 = scmp.lt.s32.totalorder %s329, 4
        %s331 = scalar_select %p330, %s329, 4
        %s332 = smul.u32 8, %s331
        %p333 = scmp.eq.s32.totalorder %s25, 0
        // Predicated region
        $region53: #{_f1_forward_padded.1} parent=39 // pred_check
          %p334 = pneg %p333
        $region54: #{_f1_forward_padded.1} parent=39 // pred_check_branch
          %336 = sbr.rel (%p334) target = $region56
        $region55: #{_f1_forward_padded.1} parent=39 // pred_region
          %337 = vst [vmem:[#allocation2] sm:$0xff] 0.0
          %338 = vst [vmem:[#allocation2 + $0x8] sm:$0xff] 0.0
          %339 = vst [vmem:[#allocation2 + $0x10] sm:$0xff] 0.0
          %340 = vst [vmem:[#allocation2 + $0x18] sm:$0xff] 0.0
        $region56: #{_f1_forward_padded.1} parent=39 // pred_fallthru
          _
        %v341 = vld [vmem:[%s279] sm:$0xff]
        %v342 = vld [vmem:[%s279 + $0x8] sm:$0xff]
        %v343 = vld [vmem:[%s279 + $0x10] sm:$0xff]
        %v344 = vld [vmem:[%s279 + $0x18] sm:$0xff]
        %v345 = vld [vmem:[#allocation5] sm:$0xff]
        %v346 = vld [vmem:[#allocation5 + $0x8] sm:$0xff]
        %v347 = vld [vmem:[#allocation5 + $0x10] sm:$0xff]
        %v348 = vld [vmem:[#allocation5 + $0x18] sm:$0xff]
        %v349 = vld [vmem:[#allocation5 + $0x20] sm:$0xff]
        %v350 = vld [vmem:[#allocation5 + $0x28] sm:$0xff]
        %v351 = vld [vmem:[#allocation5 + $0x30] sm:$0xff]
        %v352 = vld [vmem:[#allocation5 + $0x38] sm:$0xff]
        %v353 = vld [vmem:[%s326] sm:$0x1]
        %v355 = vperm.slane %v353, 0
        %vm357 = vcmask 523264
        %v359 = vsel %vm357, %v341, 0
        %v362 = vsel %vm357, %v342, 0
        %v365 = vsel %vm357, %v343, 0
        %v368 = vsel %vm357, %v344, 0
        %370 = vmatpush.msra.mxu0 0.0
        %371 = vmatpush.msra.mxu0 0.0
        %372 = vmatpush.msra.mxu0 0.0
        %373 = vmatpush.msra.mxu0 0.0
        %374 = vmatpush.msra.mxu0 0.0
        %375 = vmatpush.msra.mxu0 0.0
        %376 = vmatpush.msra.mxu0 0.0
        %377 = vmatpush.msra.mxu0 0.0
        %378 = vmatpush.msra.mxu0 %v352
        %379 = vmatpush.msra.mxu0 %v351
        %380 = vmatpush.msra.mxu0 %v350
        %381 = vmatpush.msra.mxu0 %v349
        %382 = vmatpush.msra.mxu0 %v348
        %383 = vmatpush.msra.mxu0 %v347
        %384 = vmatpush.msra.mxu0 %v346
        %385 = vmatpush.msra.mxu0 %v345
        %386 = vmatmul.f32.gmra.mxu0 %v359
        %v387 = vpop.f32.mrf.mxu0
        %v388 = vadd.f32 %v355, %v387
        %389 = vmatmul.f32.gmra.mxu0 %v362
        %v390 = vpop.f32.mrf.mxu0
        %v391 = vadd.f32 %v355, %v390
        %392 = vmatmul.f32.gmra.mxu0 %v365
        %v393 = vpop.f32.mrf.mxu0
        %v394 = vadd.f32 %v355, %v393
        %395 = vmatmul.f32.gmra.mxu0 %v368
        %v396 = vpop.f32.mrf.mxu0
        %v397 = vadd.f32 %v355, %v396
        %398 = vdwg.mxu0
        %v399 = vmax.f32 %v388, 0.0
        %v400 = vmax.f32 %v391, 0.0
        %v401 = vmax.f32 %v394, 0.0
        %v402 = vmax.f32 %v397, 0.0
        %v403 = vld [vmem:[#allocation2] sm:$0xff]
        %v404 = vld [vmem:[#allocation2 + $0x8] sm:$0xff]
        %v405 = vld [vmem:[#allocation2 + $0x10] sm:$0xff]
        %v406 = vld [vmem:[#allocation2 + $0x18] sm:$0xff]
        %v407 = vld [vmem:[#allocation7] sm:$0xff]
        %v408 = vld [vmem:[#allocation7 + $0x8] sm:$0xff]
        %v409 = vld [vmem:[#allocation7 + $0x10] sm:$0xff]
        %v410 = vld [vmem:[#allocation7 + $0x18] sm:$0xff]
        %v411 = vld [vmem:[#allocation7 + $0x20] sm:$0xff]
        %v412 = vld [vmem:[#allocation7 + $0x28] sm:$0xff]
        %v413 = vld [vmem:[#allocation7 + $0x30] sm:$0xff]
        %v414 = vld [vmem:[#allocation7 + $0x38] sm:$0xff]
        %v415 = vld [vmem:[#allocation7 + $0x40] sm:$0xff]
        %v416 = vld [vmem:[#allocation7 + $0x48] sm:$0xff]
        %v417 = vld [vmem:[#allocation7 + $0x50] sm:$0xff]
        %v418 = vld [vmem:[#allocation7 + $0x58] sm:$0xff]
        %v419 = vld [vmem:[#allocation7 + $0x60] sm:$0xff]
        %v420 = vld [vmem:[#allocation7 + $0x68] sm:$0xff]
        %v421 = vld [vmem:[#allocation7 + $0x70] sm:$0xff]
        %v422 = vld [vmem:[#allocation7 + $0x78] sm:$0xff]
        %423 = vmatpush.msra.mxu0 %v422
        %424 = vmatpush.msra.mxu0 %v421
        %425 = vmatpush.msra.mxu0 %v420
        %426 = vmatpush.msra.mxu0 %v419
        %427 = vmatpush.msra.mxu0 %v418
        %428 = vmatpush.msra.mxu0 %v417
        %429 = vmatpush.msra.mxu0 %v416
        %430 = vmatpush.msra.mxu0 %v415
        %431 = vmatpush.msra.mxu0 %v414
        %432 = vmatpush.msra.mxu0 %v413
        %433 = vmatpush.msra.mxu0 %v412
        %434 = vmatpush.msra.mxu0 %v411
        %435 = vmatpush.msra.mxu0 %v410
        %436 = vmatpush.msra.mxu0 %v409
        %437 = vmatpush.msra.mxu0 %v408
        %438 = vmatpush.msra.mxu0 %v407
        %439 = vmatmul.f32.gmra.mxu0 %v399
        %v440 = vpop.f32.mrf.mxu0
        %v441 = vadd.f32 0.0, %v440
        %442 = vmatmul.f32.gmra.mxu0 %v400
        %v443 = vpop.f32.mrf.mxu0
        %v444 = vadd.f32 0.0, %v443
        %445 = vmatmul.f32.gmra.mxu0 %v401
        %v446 = vpop.f32.mrf.mxu0
        %v447 = vadd.f32 0.0, %v446
        %448 = vmatmul.f32.gmra.mxu0 %v402
        %v449 = vpop.f32.mrf.mxu0
        %v450 = vadd.f32 0.0, %v449
        %451 = vdwg.mxu0
        %v452 = vadd.f32 %v403, %v441
        %v453 = vadd.f32 %v404, %v444
        %v454 = vadd.f32 %v405, %v447
        %v455 = vadd.f32 %v406, %v450
        %456 = vst [vmem:[#allocation2] sm:$0xff] %v452
        %457 = vst [vmem:[#allocation2 + $0x8] sm:$0xff] %v453
        %458 = vst [vmem:[#allocation2 + $0x10] sm:$0xff] %v454
        %459 = vst [vmem:[#allocation2 + $0x18] sm:$0xff] %v455
        // Predicated region
        $region57: #{_f1_forward_padded.1} parent=39 // pred_check
          %p460 = pneg %p333
        $region58: #{_f1_forward_padded.1} parent=39 // pred_check_branch
          %462 = sbr.rel (%p460) target = $region60
        $region59: #{_f1_forward_padded.1} parent=39 // pred_region
          %v463 = vld [vmem:[#allocation2] sm:$0xff]
          %v464 = vld [vmem:[#allocation2 + $0x8] sm:$0xff]
          %v465 = vld [vmem:[#allocation2 + $0x10] sm:$0xff]
          %v466 = vld [vmem:[#allocation2 + $0x18] sm:$0xff]
          %v467 = vld [vmem:[%s4] sm:$0x1]
          %v469 = vperm.slane %v467, 0
          %v471 = vadd.f32 %v463, %v469
          %v472 = vadd.f32 %v464, %v469
          %v473 = vadd.f32 %v465, %v469
          %v474 = vadd.f32 %v466, %v469
          %475 = vst [vmem:[%s318] sm:$0xff] %v471
          %476 = vst [vmem:[%s318 + $0x8] sm:$0xff] %v472
          %477 = vst [vmem:[%s318 + $0x10] sm:$0xff] %v473
          %478 = vst [vmem:[%s318 + $0x18] sm:$0xff] %v474
        $region60: #{_f1_forward_padded.1} parent=39 // pred_fallthru
          _
        %s479 = sand.u32 %s165, 1
        %s480 = sand.u32 %s165, 1
        %s481 = smul.addr %s480, 32
        %s482 = scalar_lea.vmem [#allocation8], %s481
        // Predicated region
        $region61: #{_f1_forward_padded.1} parent=39 // pred_check
          %p483 = pneg %p175
        $region62: #{_f1_forward_padded.1} parent=39 // pred_check_branch
          %485 = sbr.rel (%p483) target = $region64
        $region63: #{_f1_forward_padded.1} parent=39 // pred_region
          %s486 = smul.u32 4, %s24
          %s487 = ssub.s32 6, %s486
          %p488 = scmp.lt.s32.totalorder %s487, 4
          %s489 = scalar_select %p488, %s487, 4
          %s490 = smul.u32 8, %s489
          %p491 = scmp.ne.s32.totalorder 0, %s490
          %s492 = smul.addr %s486, 8
          %s493 = scalar_lea.vmem %s5, %s492
          // Predicated region
          $region65: #{_f1_forward_padded.1} parent=63 // pred_check
            %p494 = pneg %p491
          $region66: #{_f1_forward_padded.1} parent=63 // pred_check_branch
            %496 = sbr.rel (%p494) target = $region68
          $region67: #{_f1_forward_padded.1} parent=63 // pred_region
            // Predicated region
            $region69: #{_f1_forward_padded.1} parent=67 // pred_check
              _
            $region70: #{_f1_forward_padded.1} parent=67 // pred_check_branch
              %498 = sbr.rel (0) target = $region72
            $region71: #{_f1_forward_padded.1} parent=67 // pred_region
              // Predicated region
              $region91: #{_f1_forward_padded.1} parent=71 // pred_check
                _
              $region92: #{_f1_forward_padded.1} parent=71 // pred_check_branch
                %554 = sbr.rel (0) target = $region94
              $region93: #{_f1_forward_padded.1} parent=71 // pred_region
                %s555 = sshrl.u32 %s489, 2
                // While loop
                $region95: #{_f1_forward_padded.1} parent=93 // loop_pre_header
                  _
                $region96: #{_f1_forward_padded.1} parent=93 // loop_header
                  %s557 = sphi 0, %s559
                  %p558 = scmp.ge.s32.totalorder %s557, %s555
                  %s562 = sphi 0, %s575
                  %s563 = sphi %s482, %s578
                  %s564 = sphi %s493, %s579
                $region97: #{_f1_forward_padded.1} parent=93 // loop_header_branch
                  %561 = sbr.rel (%p558) target = $region101
                $region98: #{_f1_forward_padded.1} parent=93 // loop_body
                  %v565 = vld [vmem:[%s563] sm:$0xff]
                  %566 = vst [vmem:[%s564] sm:$0xff] %v565
                  %v567 = vld [vmem:[%s563 + $0x8] sm:$0xff]
                  %568 = vst [vmem:[%s564 + $0x8] sm:$0xff] %v567
                  %v569 = vld [vmem:[%s563 + $0x10] sm:$0xff]
                  %570 = vst [vmem:[%s564 + $0x10] sm:$0xff] %v569
                  %v571 = vld [vmem:[%s563 + $0x18] sm:$0xff]
                  %572 = vst [vmem:[%s564 + $0x18] sm:$0xff] %v571
                  %s573 = sadd.s32 1, %s562
                  %p574 = scmp.ge.s32.totalorder %s573, %s555
                  %s575 = scalar_select %p574, 0, %s573
                  %s576 = smul.u32 %s575, 32
                  %s577 = smul.u32 %s575, 32
                  %s578 = scalar_lea.vmem %s482, %s576 [#allocation8]
                  %s579 = scalar_lea.vmem %s493, %s577
                $region99: #{_f1_forward_padded.1} parent=93 // loop_footer
                  %s559 = sadd.s32 %s557, 1
                $region100: #{_f1_forward_padded.1} parent=93 // loop_footer_branch
                  %556 = sbr.rel target = $region96
                $region101: #{_f1_forward_padded.1} parent=93 // loop_exit
                  _
                %s580 = sshrl.u32 %s489, 2
                %s581 = sand.u32 %s489, 3
                %s582 = smul.u32 %s580, 4
                %s583 = smul.u32 8, %s582
                %s584 = scalar_lea.vmem %s482, %s583 [#allocation8]
                %s585 = smul.u32 8, %s582
                %s586 = scalar_lea.vmem %s493, %s585
                // While loop
                $region102: #{_f1_forward_padded.1} parent=93 // loop_pre_header
                  _
                $region103: #{_f1_forward_padded.1} parent=93 // loop_header
                  %s588 = sphi 0, %s590
                  %p589 = scmp.ge.s32.totalorder %s588, %s581
                  %s593 = sphi 0, %s600
                  %s594 = sphi %s584, %s603
                  %s595 = sphi %s586, %s604
                $region104: #{_f1_forward_padded.1} parent=93 // loop_header_branch
                  %592 = sbr.rel (%p589) target = $region108
                $region105: #{_f1_forward_padded.1} parent=93 // loop_body
                  %v596 = vld [vmem:[%s594] sm:$0xff]
                  %597 = vst [vmem:[%s595] sm:$0xff] %v596
                  %s598 = sadd.s32 1, %s593
                  %p599 = scmp.ge.s32.totalorder %s598, %s581
                  %s600 = scalar_select %p599, 0, %s598
                  %s601 = smul.u32 %s600, 8
                  %s602 = smul.u32 %s600, 8
                  %s603 = scalar_lea.vmem %s584, %s601 [#allocation8]
                  %s604 = scalar_lea.vmem %s586, %s602
                $region106: #{_f1_forward_padded.1} parent=93 // loop_footer
                  %s590 = sadd.s32 %s588, 1
                $region107: #{_f1_forward_padded.1} parent=93 // loop_footer_branch
                  %587 = sbr.rel target = $region103
                $region108: #{_f1_forward_padded.1} parent=93 // loop_exit
                  _
              $region94: #{_f1_forward_padded.1} parent=71 // pred_fallthru
                _
              // Predicated region
              $region109: #{_f1_forward_padded.1} parent=71 // pred_check
                _
              $region110: #{_f1_forward_padded.1} parent=71 // pred_check_branch
                %606 = sbr.rel target = $region112
              $region111: #{_f1_forward_padded.1} parent=71 // pred_region
                _
              $region112: #{_f1_forward_padded.1} parent=71 // pred_fallthru
                _
            $region72: #{_f1_forward_padded.1} parent=67 // pred_fallthru
              _
            // Predicated region
            $region73: #{_f1_forward_padded.1} parent=67 // pred_check
              _
            $region74: #{_f1_forward_padded.1} parent=67 // pred_check_branch
              %500 = sbr.rel target = $region76
            $region75: #{_f1_forward_padded.1} parent=67 // pred_region
              %s502 = ssub.s32 256, 1
              %s503 = sshrl.u32 %s489, 2
              // While loop
              $region77: #{_f1_forward_padded.1} parent=75 // loop_pre_header
                _
              $region78: #{_f1_forward_padded.1} parent=75 // loop_header
                %s505 = sphi 0, %s507
                %p506 = scmp.ge.s32.totalorder %s505, %s503
                %s510 = sphi 0, %s523
                %s511 = sphi %s482, %s526
                %s512 = sphi %s493, %s527
              $region79: #{_f1_forward_padded.1} parent=75 // loop_header_branch
                %509 = sbr.rel (%p506) target = $region83
              $region80: #{_f1_forward_padded.1} parent=75 // loop_body
                %v513 = vld [vmem:[%s511] sm:%s502]
                %514 = vst [vmem:[%s512] sm:%s502] %v513
                %v515 = vld [vmem:[%s511 + $0x8] sm:%s502]
                %516 = vst [vmem:[%s512 + $0x8] sm:%s502] %v515
                %v517 = vld [vmem:[%s511 + $0x10] sm:%s502]
                %518 = vst [vmem:[%s512 + $0x10] sm:%s502] %v517
                %v519 = vld [vmem:[%s511 + $0x18] sm:%s502]
                %520 = vst [vmem:[%s512 + $0x18] sm:%s502] %v519
                %s521 = sadd.s32 1, %s510
                %p522 = scmp.ge.s32.totalorder %s521, %s503
                %s523 = scalar_select %p522, 0, %s521
                %s524 = smul.u32 %s523, 32
                %s525 = smul.u32 %s523, 32
                %s526 = scalar_lea.vmem %s482, %s524 [#allocation8]
                %s527 = scalar_lea.vmem %s493, %s525
              $region81: #{_f1_forward_padded.1} parent=75 // loop_footer
                %s507 = sadd.s32 %s505, 1
              $region82: #{_f1_forward_padded.1} parent=75 // loop_footer_branch
                %504 = sbr.rel target = $region78
              $region83: #{_f1_forward_padded.1} parent=75 // loop_exit
                _
              %s528 = sshrl.u32 %s489, 2
              %s529 = sand.u32 %s489, 3
              %s530 = smul.u32 %s528, 4
              %s531 = smul.u32 8, %s530
              %s532 = scalar_lea.vmem %s482, %s531 [#allocation8]
              %s533 = smul.u32 8, %s530
              %s534 = scalar_lea.vmem %s493, %s533
              // While loop
              $region84: #{_f1_forward_padded.1} parent=75 // loop_pre_header
                _
              $region85: #{_f1_forward_padded.1} parent=75 // loop_header
                %s536 = sphi 0, %s538
                %p537 = scmp.ge.s32.totalorder %s536, %s529
                %s541 = sphi 0, %s548
                %s542 = sphi %s532, %s551
                %s543 = sphi %s534, %s552
              $region86: #{_f1_forward_padded.1} parent=75 // loop_header_branch
                %540 = sbr.rel (%p537) target = $region90
              $region87: #{_f1_forward_padded.1} parent=75 // loop_body
                %v544 = vld [vmem:[%s542] sm:%s502]
                %545 = vst [vmem:[%s543] sm:%s502] %v544
                %s546 = sadd.s32 1, %s541
                %p547 = scmp.ge.s32.totalorder %s546, %s529
                %s548 = scalar_select %p547, 0, %s546
                %s549 = smul.u32 %s548, 8
                %s550 = smul.u32 %s548, 8
                %s551 = scalar_lea.vmem %s532, %s549 [#allocation8]
                %s552 = scalar_lea.vmem %s534, %s550
              $region88: #{_f1_forward_padded.1} parent=75 // loop_footer
                %s538 = sadd.s32 %s536, 1
              $region89: #{_f1_forward_padded.1} parent=75 // loop_footer_branch
                %535 = sbr.rel target = $region85
              $region90: #{_f1_forward_padded.1} parent=75 // loop_exit
                _
            $region76: #{_f1_forward_padded.1} parent=67 // pred_fallthru
              _
          $region68: #{_f1_forward_padded.1} parent=63 // pred_fallthru
            _
          %607 = vnop
        $region64: #{_f1_forward_padded.1} parent=39 // pred_fallthru
          _
      $region40: #{_f1_forward_padded.1} parent=5 // pred_fallthru
        _
      %p608 = scmp.le.s32.totalorder 2, %s15
      // Predicated region
      $region113: #{_f1_forward_padded.1} parent=5 // pred_check
        %p609 = pneg %p608
      $region114: #{_f1_forward_padded.1} parent=5 // pred_check_branch
        %611 = sbr.rel (%p609) target = $region116
      $region115: #{_f1_forward_padded.1} parent=5 // pred_region
        %s612 = ssub.s32 %s15, 2
        // Predicated region
        $region117: #{_f1_forward_padded.1} parent=115 // pred_check
          %p613 = pneg %p181
        $region118: #{_f1_forward_padded.1} parent=115 // pred_check_branch
          %615 = sbr.rel (%p613) target = $region120
        $region119: #{_f1_forward_padded.1} parent=115 // pred_region
          %s616 = sand.u32 %s166, 1
          %s617 = sand.u32 %s166, 1
          %s618 = smul.addr %s617, 32
          %s619 = scalar_lea.vmem [#allocation8], %s618
        $region120: #{_f1_forward_padded.1} parent=115 // pred_fallthru
          _
      $region116: #{_f1_forward_padded.1} parent=5 // pred_fallthru
        _
    $region6: #{_f1_forward_padded.1} parent=1 // loop_footer
      %s19 = sadd.s32 1, %s15
    $region7: #{_f1_forward_padded.1} parent=1 // loop_footer_branch
      %14 = sbr.rel target = $region3
    $region8: #{_f1_forward_padded.1} parent=1 // loop_exit
      _
    %620 = vsyncpa [#allocation4], 1
    %s621 = scalar_lea.sflag [#allocation4], 1
    %622 = vsyncpa %s621, 1
    %623 = vsyncpa [#allocation6], 1

</llo_original>
